<compile_context>
chip_gen: v7x
topology: tpu7x:2x2x1
jax: 0.10.0
libtpu: 0.0.40
codegen_flags: <defaults>
</compile_context>

<pallas_src>
import functools

import jax
import jax.numpy as jnp
from jax.experimental import pallas as pl
from jax.experimental.pallas import tpu as pltpu


def _norm_kernel(x_ref, alpha_ref, bias_ref, o_ref, *, d_model, eps):
    # x_ref: (rows_per_block, d_model) tile in VMEM
    x = x_ref[...].astype(jnp.float32)
    mean = jnp.mean(x, axis=-1, keepdims=True)
    xc = x - mean
    # unbiased std (ddof=1) to match torch.Tensor.std() default
    var = jnp.sum(xc * xc, axis=-1, keepdims=True) * jnp.float32(1.0 / (d_model - 1))
    std = jnp.sqrt(var)
    # Per-row reciprocal on the (rows, 1) column only (exact, to preserve the
    # 1e-5 tolerance vs. the divide-based reference), then broadcast-multiply.
    inv = pl.reciprocal(std + jnp.float32(eps), approx=False)
    alpha = alpha_ref[...]  # (1, d_model) f32
    bias = bias_ref[...]    # (1, d_model) f32
    out = (xc * inv) * alpha + bias
    o_ref[...] = out.astype(o_ref.dtype)


def _pick_tiling(n_rows, d_model, itemsize, sublane):
    """Pick rows_per_block + scoped VMEM limit from the device generation."""
    kind = ""
    try:
        kind = jax.devices()[0].device_kind.lower()
    except Exception:
        pass
    if "v7" in kind:
        # v7x: only 64 MiB physical VMEM per TensorCore — keep headroom.
        vmem_limit = 40 << 20
    else:
        # v5e / v6e: 128 MiB physical; default scoped limit is far smaller.
        vmem_limit = 96 << 20

    # Double-buffered input + output tiles (2 bufs * 2 arrays) must fit well
    # under the scoped limit; keep them to ~half of it.
    tile_budget = vmem_limit // 2
    per_row_bytes = 4 * d_model * itemsize  # 2 bufs * (in + out) per row
    rows_budget = max(sublane, tile_budget // max(per_row_bytes, 1))

    # Don't allocate more rows than the (rounded-up) problem actually has.
    rows_cap = max(sublane, ((n_rows + sublane - 1) // sublane) * sublane)

    rows = min(int(rows_budget), rows_cap, 2048)
    rows = max(sublane, (rows // sublane) * sublane)
    return rows, vmem_limit


def norm_pallas(x, alpha, bias, eps=1e-6, rows_per_block=None):
    """Pallas implementation of Norm.forward.

    x:     (..., d_model)
    alpha: (d_model,)
    bias:  (d_model,)
    """
    orig_shape = x.shape
    d_model = orig_shape[-1]
    x2 = x.reshape(-1, d_model)
    n_rows = x2.shape[0]

    itemsize = jnp.dtype(x.dtype).itemsize
    sublane = {4: 8, 2: 16, 1: 32}.get(itemsize, 8)

    auto_rows, vmem_limit = _pick_tiling(n_rows, d_model, itemsize, sublane)
    if rows_per_block is None:
        rows_per_block = auto_rows
    else:
        rows_per_block = max(sublane, (rows_per_block // sublane) * sublane)

    # Pre-cast the (small) parameters once; constant index_map keeps them
    # resident in VMEM across the whole grid.
    alpha2 = alpha.reshape(1, d_model).astype(jnp.float32)
    bias2 = bias.reshape(1, d_model).astype(jnp.float32)

    # No padding round-trip: ragged boundary block is handled by Pallas
    # (boundary stores masked; rows are fully independent).
    grid = (pl.cdiv(n_rows, rows_per_block),)

    kernel = functools.partial(_norm_kernel, d_model=d_model, eps=eps)

    out = pl.pallas_call(
        kernel,
        out_shape=jax.ShapeDtypeStruct((n_rows, d_model), x.dtype),
        grid_spec=pltpu.PrefetchScalarGridSpec(
            num_scalar_prefetch=0,
            grid=grid,
            in_specs=[
                pl.BlockSpec((rows_per_block, d_model), lambda i: (i, 0)),
                pl.BlockSpec((1, d_model), lambda i: (0, 0)),
                pl.BlockSpec((1, d_model), lambda i: (0, 0)),
            ],
            out_specs=pl.BlockSpec((rows_per_block, d_model), lambda i: (i, 0)),
        ),
        compiler_params=pltpu.CompilerParams(
            dimension_semantics=("parallel",),
            vmem_limit_bytes=vmem_limit,
        ),
    )(x2, alpha2, bias2)

    return out.reshape(orig_shape)


def norm_ref(x, alpha, bias, eps=1e-6):
    """Pure-JAX reference matching the PyTorch module (unbiased std)."""
    mean = jnp.mean(x, axis=-1, keepdims=True)
    xc = x - mean
    d = x.shape[-1]
    var = jnp.sum(xc * xc, axis=-1, keepdims=True) / (d - 1)
    std = jnp.sqrt(var)
    return alpha * xc / (std + eps) + bias


if __name__ == "__main__":
    key = jax.random.PRNGKey(0)

    batch, seq, d_model = 2, 8, 32
    x = jax.random.normal(key, (batch, seq, d_model), dtype=jnp.float32)

    # Deterministic parameter init matching nn.Parameter(torch.ones / torch.zeros)
    alpha = jnp.ones((d_model,), dtype=jnp.float32)
    bias = jnp.zeros((d_model,), dtype=jnp.float32)

    out = norm_pallas(x, alpha, bias)
    out = jax.block_until_ready(out)

    expected = norm_ref(x, alpha, bias)
    assert out.shape == x.shape
    assert jnp.allclose(out, expected, atol=1e-5, rtol=1e-5), "mismatch vs reference"

    print("KERNEL_OK")
</pallas_src>

<mosaic_0001>
module attributes {stable_mosaic.version = 11 : i64} {
  func.func @_norm_kernel(%arg0: i32, %arg1: memref<16x32xf32, #tpu.memory_space<vmem>>, %arg2: memref<1x32xf32, #tpu.memory_space<vmem>>, %arg3: memref<1x32xf32, #tpu.memory_space<vmem>>, %arg4: memref<16x32xf32, #tpu.memory_space<vmem>>) attributes {dimension_semantics = [#tpu.dimension_semantics<parallel>], iteration_bounds = array<i64: 1>, scalar_prefetch = 0 : i64, scratch_operands = 0 : i64, tpu.core_type = #tpu.core_type<tc>, window_params = [{transform_indices = @transform_0, window_bounds = array<i64: 16, 32>}, {pipeline_mode = #tpu.pipeline_mode<synchronous>, transform_indices = @transform_1, window_bounds = array<i64: 1, 32>}, {pipeline_mode = #tpu.pipeline_mode<synchronous>, transform_indices = @transform_2, window_bounds = array<i64: 1, 32>}, {transform_indices = @transform_3, window_bounds = array<i64: 16, 32>}]} {
    %c0 = arith.constant 0 : index
    %c0_0 = arith.constant 0 : index
    %0 = vector.load %arg1[%c0, %c0_0] : memref<16x32xf32, #tpu.memory_space<vmem>>, vector<16x32xf32>
    %cst = arith.constant dense<0.000000e+00> : vector<16xf32>
    %1 = vector.multi_reduction <add>, %0, %cst [1] : vector<16x32xf32> to vector<16xf32>
    %2 = vector.shape_cast %1 : vector<16xf32> to vector<16x1xf32>
    %cst_1 = arith.constant 3.200000e+01 : f32
    %3 = vector.broadcast %cst_1 : f32 to vector<16x1xf32>
    %4 = arith.divf %2, %3 : vector<16x1xf32>
    %5 = vector.broadcast %4 : vector<16x1xf32> to vector<16x32xf32>
    %6 = arith.subf %0, %5 : vector<16x32xf32>
    %7 = arith.mulf %6, %6 : vector<16x32xf32>
    %cst_2 = arith.constant dense<0.000000e+00> : vector<16xf32>
    %8 = vector.multi_reduction <add>, %7, %cst_2 [1] : vector<16x32xf32> to vector<16xf32>
    %9 = vector.shape_cast %8 : vector<16xf32> to vector<16x1xf32>
    %cst_3 = arith.constant 0.0322580636 : f32
    %10 = vector.broadcast %cst_3 : f32 to vector<16x1xf32>
    %11 = arith.mulf %9, %10 : vector<16x1xf32>
    %12 = math.sqrt %11 : vector<16x1xf32>
    %cst_4 = arith.constant 9.99999997E-7 : f32
    %13 = vector.broadcast %cst_4 : f32 to vector<16x1xf32>
    %14 = arith.addf %12, %13 : vector<16x1xf32>
    %15 = tpu.reciprocal %14 : vector<16x1xf32> -> vector<16x1xf32>
    %c0_5 = arith.constant 0 : index
    %c0_6 = arith.constant 0 : index
    %16 = vector.load %arg2[%c0_5, %c0_6] : memref<1x32xf32, #tpu.memory_space<vmem>>, vector<1x32xf32>
    %c0_7 = arith.constant 0 : index
    %c0_8 = arith.constant 0 : index
    %17 = vector.load %arg3[%c0_7, %c0_8] : memref<1x32xf32, #tpu.memory_space<vmem>>, vector<1x32xf32>
    %18 = vector.broadcast %15 : vector<16x1xf32> to vector<16x32xf32>
    %19 = arith.mulf %6, %18 : vector<16x32xf32>
    %20 = vector.broadcast %16 : vector<1x32xf32> to vector<16x32xf32>
    %21 = arith.mulf %19, %20 : vector<16x32xf32>
    %22 = vector.broadcast %17 : vector<1x32xf32> to vector<16x32xf32>
    %23 = arith.addf %21, %22 : vector<16x32xf32>
    %c0_9 = arith.constant 0 : index
    %c0_10 = arith.constant 0 : index
    %24 = vector.load %arg4[%c0_9, %c0_10] : memref<16x32xf32, #tpu.memory_space<vmem>>, vector<16x32xf32>
    tpu.vector_store %arg4[%c0_9, %c0_10], %23 {strides = array<i32>} : memref<16x32xf32, #tpu.memory_space<vmem>>, vector<16x32xf32>,
    return
  }
  func.func @transform_0(%arg0: i32) -> (i32, i32) {
    %c0_i32 = arith.constant 0 : i32
    %c0_i32_0 = arith.constant 0 : i32
    return %arg0, %c0_i32 : i32, i32
  }
  func.func @transform_1(%arg0: i32) -> (i32, i32) {
    %c0_i32 = arith.constant 0 : i32
    %c0_i32_0 = arith.constant 0 : i32
    %c0_i32_1 = arith.constant 0 : i32
    return %c0_i32, %c0_i32_0 : i32, i32
  }
  func.func @transform_2(%arg0: i32) -> (i32, i32) {
    %c0_i32 = arith.constant 0 : i32
    %c0_i32_0 = arith.constant 0 : i32
    %c0_i32_1 = arith.constant 0 : i32
    return %c0_i32, %c0_i32_0 : i32, i32
  }
  func.func @transform_3(%arg0: i32) -> (i32, i32) {
    %c0_i32 = arith.constant 0 : i32
    %c0_i32_0 = arith.constant 0 : i32
    return %arg0, %c0_i32 : i32, i32
  }
}

</mosaic_0001>

<llo_original>
// kernel: tpu_custom_call.1
$region0: #{tpu_custom_call.1}
  #allocation0 [shape = 'u32[]', space=smem, size = 0x4, offset = 0x4, fixed_abs, tag = 'smem constant byte address 0x4 - core index']
  #allocation1 [shape = 'u32[144,128]{1,0:T(1,128)}', space=vmem, size = 0x12000, scoped, tag = 'internal scratch']
  %s0 = inlined_call_operand.hbm [shape: f32[16,32], index: 0, kind: input, shape index: {}]
  %s1 = inlined_call_operand.hbm [shape: f32[1,32], index: 1, kind: input, shape index: {}]
  %s2 = inlined_call_operand.hbm [shape: f32[1,32], index: 2, kind: input, shape index: {}]
  %s3 = inlined_call_operand.hbm [shape: f32[16,32], index: 3, kind: output, shape index: {}]
  %s4 = sld [smem:[#allocation0]]
  $region34: #{tpu_custom_call.1} parent=0
    _
  %s6 = ssub.s32 1, %s4
  %s7 = scalar_select 0, %s6, %s4
  $region1: #{tpu_custom_call.1} parent=0
    #allocation2 [shape = 'u8[8192]{0}', space=vmem, size = 0x2000, scoped, tag = 'input window, operand 0, single buffered']
    #allocation3 [shape = 's32[1]{0}', space=sflag, size = 0x4, scoped, tag = 'scoped memory for tpu_custom_call.1']
    #allocation4 [shape = 's32[1]{0}', space=sflag, size = 0x4, scoped, tag = 'scoped memory for tpu_custom_call.1']
    #allocation5 [shape = 'u8[512]{0}', space=vmem, size = 0x400, scoped, tag = 'input window, operand 1, single buffered']
    #allocation6 [shape = 's32[1]{0}', space=sflag, size = 0x4, scoped, tag = 'scoped memory for tpu_custom_call.1']
    #allocation7 [shape = 'u8[512]{0}', space=vmem, size = 0x400, scoped, tag = 'input window, operand 2, single buffered']
    #allocation8 [shape = 'u8[8192]{0}', space=vmem, size = 0x2000, scoped, tag = 'output window, operand 0, single buffered']
    %8 = vsyncpa [#allocation3], 0
    %9 = vsyncpa [#allocation6], 0
    %10 = vsyncpa [#allocation4], 0
    // Predicated region
    $region2: #{tpu_custom_call.1} parent=1 // pred_check
      _
    $region3: #{tpu_custom_call.1} parent=1 // pred_check_branch
      %12 = sbr.rel (0) target = $region5
    $region4: #{tpu_custom_call.1} parent=1 // pred_region
      %s14 = ssub.s32 256, 256
      %15 = vsyncadd [#allocation3], %s14
      %s16 = sshll.u32 [#allocation2], 4
      %s17 = int_to_ptr.vmem [resolvable:$true] %s16
      %22 = dma.hbm_to_vmem [thread:$0]  %s0, 256, %s17, [#allocation3], 128, 128, 8
    $region5: #{tpu_custom_call.1} parent=1 // pred_fallthru
      _
    // Predicated region
    $region6: #{tpu_custom_call.1} parent=1 // pred_check
      _
    $region7: #{tpu_custom_call.1} parent=1 // pred_check_branch
      %24 = sbr.rel (0) target = $region9
    $region8: #{tpu_custom_call.1} parent=1 // pred_region
      %s26 = ssub.s32 16, 16
      %27 = vsyncadd [#allocation6], %s26
      %s29 = sshll.u32 [#allocation5], 4
      %s30 = int_to_ptr.vmem [resolvable:$true] %s29
      %32 = dma.hbm_to_vmem [thread:$0]  %s1, 16, %s30, [#allocation6]
    $region9: #{tpu_custom_call.1} parent=1 // pred_fallthru
      _
    // Predicated region
    $region10: #{tpu_custom_call.1} parent=1 // pred_check
      _
    $region11: #{tpu_custom_call.1} parent=1 // pred_check_branch
      %34 = sbr.rel (0) target = $region13
    $region12: #{tpu_custom_call.1} parent=1 // pred_region
      %s36 = ssub.s32 16, 16
      %37 = vsyncadd [#allocation6], %s36
      %s39 = sshll.u32 [#allocation7], 4
      %s40 = int_to_ptr.vmem [resolvable:$true] %s39
      %42 = dma.hbm_to_vmem [thread:$0]  %s2, 16, %s40, [#allocation6]
    $region13: #{tpu_custom_call.1} parent=1 // pred_fallthru
      _
    // Predicated region
    $region14: #{tpu_custom_call.1} parent=1 // pred_check
      _
    $region15: #{tpu_custom_call.1} parent=1 // pred_check_branch
      %44 = sbr.rel (0) target = $region17
    $region16: #{tpu_custom_call.1} parent=1 // pred_region
      %45 = dma.done [#allocation3], 256
    $region17: #{tpu_custom_call.1} parent=1 // pred_fallthru
      _
    // Predicated region
    $region18: #{tpu_custom_call.1} parent=1 // pred_check
      _
    $region19: #{tpu_custom_call.1} parent=1 // pred_check_branch
      %47 = sbr.rel (0) target = $region21
    $region20: #{tpu_custom_call.1} parent=1 // pred_region
      %48 = dma.done [#allocation6], 16
    $region21: #{tpu_custom_call.1} parent=1 // pred_fallthru
      _
    // Predicated region
    $region22: #{tpu_custom_call.1} parent=1 // pred_check
      _
    $region23: #{tpu_custom_call.1} parent=1 // pred_check_branch
      %50 = sbr.rel (0) target = $region25
    $region24: #{tpu_custom_call.1} parent=1 // pred_region
      %51 = dma.done [#allocation6], 16
    $region25: #{tpu_custom_call.1} parent=1 // pred_fallthru
      _
    %v52 = vld [vmem:[#allocation2] sm:$0xff]
    %v53 = vld [vmem:[#allocation2 + $0x8] sm:$0xff]
    %vm54 = vcmask 261120
    %v55 = vsel %vm54, %v52, 0.0
    %56 = vadd.xlane.f32.xlu0 %v55
    %v57 = vpop.xlane.xlu0 %56
    %v58 = vsel %vm54, %v53, 0.0
    %59 = vadd.xlane.f32.xlu0 %v58
    %v60 = vpop.xlane.xlu0 %59
    %v61 = vrcp.pop 32.0
    %v62 = vmul.f32 %v57, %v61
    %v63 = vmul.f32 %v60, %v61
    %v64 = vsub.f32 %v52, %v62
    %v65 = vsub.f32 %v53, %v63
    %v66 = vmul.f32 %v64, %v64
    %v67 = vmul.f32 %v65, %v65
    %v68 = vsel %vm54, %v66, 0.0
    %69 = vadd.xlane.f32.xlu0 %v68
    %v70 = vpop.xlane.xlu0 %69
    %v71 = vsel %vm54, %v67, 0.0
    %72 = vadd.xlane.f32.xlu0 %v71
    %v73 = vpop.xlane.xlu0 %72
    %v74 = vmul.f32 %v70, 0.032258064
    %v75 = vmul.f32 %v73, 0.032258064
    %v76 = vrsqrt.pop %v74
    %v77 = vmul.f32 %v74, %v76
    %vm78 = vcmp.eq.f32.partialorder %v74, inf
    %v79 = vsel %vm78, %v74, %v77
    %vm80 = vcmp.eq.f32.partialorder %v74, 0.0
    %v81 = vand.u32 %v74, 2147483648
    %v82 = vsel %vm80, %v81, %v79
    %v83 = vrsqrt.pop %v75
    %v84 = vmul.f32 %v75, %v83
    %vm85 = vcmp.eq.f32.partialorder %v75, inf
    %v86 = vsel %vm85, %v75, %v84
    %vm87 = vcmp.eq.f32.partialorder %v75, 0.0
    %v88 = vand.u32 %v75, 2147483648
    %v89 = vsel %vm87, %v88, %v86
    %v90 = vadd.f32 %v82, 1e-06
    %v91 = vadd.f32 %v89, 1e-06
    %v92 = vrcp.pop %v90
    %v93 = vrcp.pop %v91
    %v94 = vld [vmem:[#allocation5] sm:$0x1]
    %v95 = vld [vmem:[#allocation7] sm:$0x1]
    %v96 = vmul.f32 %v64, %v92
    %v97 = vmul.f32 %v65, %v93
    %v99 = vlaneseq
    %v100 = vshrl.u32 %v99, 7
    %v101 = vsub.s32 0, %v100
    %v102 = vrot.slane %v94, %v101
    %v104 = vmul.f32 %v96, %v102
    %v105 = vmul.f32 %v97, %v102
    %v107 = vlaneseq
    %v108 = vshrl.u32 %v107, 7
    %v109 = vsub.s32 0, %v108
    %v110 = vrot.slane %v95, %v109
    %v112 = vadd.f32 %v104, %v110
    %v113 = vadd.f32 %v105, %v110
    %114 = vst.msk [vmem:[#allocation8] sm:$0xff] %vm54, %v112
    %115 = vst.msk [vmem:[#allocation8 + $0x8] sm:$0xff] %vm54, %v113
    // Predicated region
    $region26: #{tpu_custom_call.1} parent=1 // pred_check
      _
    $region27: #{tpu_custom_call.1} parent=1 // pred_check_branch
      %117 = sbr.rel (0) target = $region29
    $region28: #{tpu_custom_call.1} parent=1 // pred_region
      %s119 = ssub.s32 256, 256
      %120 = vsyncadd [#allocation4], %s119
      %s121 = sshll.u32 [#allocation8], 4
      %s122 = int_to_ptr.vmem [resolvable:$true] %s121
      %127 = dma.vmem_to_hbm [thread:$0]  %s122, 256, %s3, [#allocation4], 128, 128, 8
    $region29: #{tpu_custom_call.1} parent=1 // pred_fallthru
      _
    // Predicated region
    $region30: #{tpu_custom_call.1} parent=1 // pred_check
      _
    $region31: #{tpu_custom_call.1} parent=1 // pred_check_branch
      %129 = sbr.rel (0) target = $region33
    $region32: #{tpu_custom_call.1} parent=1 // pred_region
      %130 = dma.done [#allocation4], 256
    $region33: #{tpu_custom_call.1} parent=1 // pred_fallthru
      _
    %131 = vsyncpa [#allocation3], 1
    %132 = vsyncpa [#allocation6], 1
    %133 = vsyncpa [#allocation4], 1

</llo_original>
